<compile_context>
chip_gen: v6e
topology: v6e:2x2x1
jax: 0.10.0
libtpu: 0.0.40
codegen_flags: <defaults>
</compile_context>

<pallas_src>
import functools

import jax
import jax.numpy as jnp
import numpy as np
from jax.experimental import pallas as pl
from jax.experimental.pallas import tpu as pltpu

ACTOR_MODEL_SIZE = 256   # args.actor_model_size
LANE = 128               # vreg lane width: pad act_dim up to this for lane-dense stores
SUBLANE_BF16 = 16        # bf16 sublane packing: batch tiles must be multiples of 16
DEFAULT_BLOCK_B = 1024   # large-batch tile size (per review: 512-1024)


def _cdiv(a, b):
    return -(-a // b)


def _round_up(n, m):
    return _cdiv(n, m) * m


def _pick_tile(batch, block_b):
    """Balanced batch-tile size (multiple of 16 for bf16 sublane packing)."""
    if batch < 32:
        # Tiny batch: single padded tile; splitting across cores isn't worth it.
        return _round_up(max(batch, 1), SUBLANE_BF16)
    # >= 2 tiles so ("parallel",) shards across both v7x TensorCores; balance tiles so
    # padding waste is < one sublane per tile (e.g. B=300 -> 2 tiles of 160, pad 320).
    n_tiles = max(_cdiv(batch, block_b), 2)
    return _round_up(_cdiv(batch, n_tiles), SUBLANE_BF16)


def actor_kernel(x_ref, w1_ref, b1_ref, w2_ref, b2_ref, w3_ref, b3_ref,
                 scale_ref, bias_ref, o_ref):
    # fc1 + ReLU: bf16 operands -> single-pass MXU, f32 accumulation; epilogue on VPU.
    h1 = jnp.dot(x_ref[...], w1_ref[...], preferred_element_type=jnp.float32)
    h1 = jnp.maximum(h1 + b1_ref[...], 0.0)
    # fc2 + ReLU (cast activation back to bf16 for the MXU).
    h2 = jnp.dot(h1.astype(jnp.bfloat16), w2_ref[...],
                 preferred_element_type=jnp.float32)
    h2 = jnp.maximum(h2 + b2_ref[...], 0.0)
    # fc_mu + tanh (EUP) + affine rescale into the action range; lane-padded output.
    mu = jnp.dot(h2.astype(jnp.bfloat16), w3_ref[...],
                 preferred_element_type=jnp.float32)
    mu = jnp.tanh(mu + b3_ref[...])
    o_ref[...] = (mu * scale_ref[...] + bias_ref[...]).astype(o_ref.dtype)


def prepare_params(p):
    """One-time parameter prep (hoisted out of the forward path).

    Casts weights to bf16 (native MXU path on v5e/v6e/v7x) and lane-pads the final
    layer / action_scale / action_bias to 128 so the kernel's output store is a full
    unmasked vst. Biases stay f32 (they are added to the f32 accumulator).
    """
    act_dim = p["w3"].shape[1]
    act_pad = _round_up(max(act_dim, 1), LANE)
    pn = act_pad - act_dim
    return dict(
        w1=p["w1"].astype(jnp.bfloat16),
        b1=p["b1"].astype(jnp.float32),
        w2=p["w2"].astype(jnp.bfloat16),
        b2=p["b2"].astype(jnp.float32),
        w3=jnp.pad(p["w3"], ((0, 0), (0, pn))).astype(jnp.bfloat16),
        b3=jnp.pad(p["b3"], ((0, 0), (0, pn))).astype(jnp.float32),
        action_scale=jnp.pad(p["action_scale"], ((0, 0), (0, pn)),
                             constant_values=1.0).astype(jnp.float32),
        action_bias=jnp.pad(p["action_bias"], ((0, 0), (0, pn))).astype(jnp.float32),
    )


@functools.partial(jax.jit, static_argnames=("act_dim", "block_b"))
def actor_forward(x, prepared, *, act_dim, block_b=DEFAULT_BLOCK_B):
    """Actor MLP forward as one batch-tiled Pallas kernel.

    x: (B, obs_dim) float32 (or bf16)
    prepared: output of prepare_params(...)
    returns: (B, act_dim) float32
    """
    B, obs_dim = x.shape
    hidden = prepared["w1"].shape[1]
    act_pad = prepared["w3"].shape[1]

    tb = _pick_tile(B, block_b)
    b_pad = _round_up(B, tb)

    x = x.astype(jnp.bfloat16)
    if b_pad != B:
        x = jnp.pad(x, ((0, b_pad - B), (0, 0)))

    grid = (b_pad // tb,)
    # Constant index_map: weights/biases/scale are DMA'd into VMEM once and stay
    # resident across all batch tiles.
    resident = lambda i: (0, 0)

    out = pl.pallas_call(
        actor_kernel,
        out_shape=jax.ShapeDtypeStruct((b_pad, act_pad), jnp.float32),
        grid=grid,
        in_specs=[
            pl.BlockSpec((tb, obs_dim), lambda i: (i, 0)),    # x: tiled along batch
            pl.BlockSpec((obs_dim, hidden), resident),        # w1 (bf16)
            pl.BlockSpec((1, hidden), resident),              # b1 (f32)
            pl.BlockSpec((hidden, hidden), resident),         # w2 (bf16)
            pl.BlockSpec((1, hidden), resident),              # b2 (f32)
            pl.BlockSpec((hidden, act_pad), resident),        # w3 (bf16, lane-padded)
            pl.BlockSpec((1, act_pad), resident),             # b3 (f32, lane-padded)
            pl.BlockSpec((1, act_pad), resident),             # action_scale
            pl.BlockSpec((1, act_pad), resident),             # action_bias
        ],
        out_specs=pl.BlockSpec((tb, act_pad), lambda i: (i, 0)),
        compiler_params=pltpu.CompilerParams(
            dimension_semantics=("parallel",)),               # v7x: shard tiles over both TCs
    )(x, prepared["w1"], prepared["b1"], prepared["w2"], prepared["b2"],
      prepared["w3"], prepared["b3"], prepared["action_scale"], prepared["action_bias"])

    # Slice back to the true (B, act_dim); reads only B*act_dim elements of the padded
    # buffer. Consumers wanting zero extra ops can keep the padded output instead.
    return out[:B, :act_dim]


def init_params(key, obs_dim, act_dim, hidden=ACTOR_MODEL_SIZE):
    """Deterministic synthetic parameters (PyTorch-Linear-like uniform init), f32."""
    ks = jax.random.split(key, 6)

    def linear(kw, kb, fan_in, fan_out):
        bound = 1.0 / np.sqrt(fan_in)
        w = jax.random.uniform(kw, (fan_in, fan_out), jnp.float32, -bound, bound)
        b = jax.random.uniform(kb, (1, fan_out), jnp.float32, -bound, bound)
        return w, b

    w1, b1 = linear(ks[0], ks[1], obs_dim, hidden)
    w2, b2 = linear(ks[2], ks[3], hidden, hidden)
    w3, b3 = linear(ks[4], ks[5], hidden, act_dim)

    # Synthetic action space: low = -1, high = +1 per action dim
    #   action_scale = (high - low) / 2 = 1.0 ; action_bias = (high + low) / 2 = 0.0
    low = -np.ones((act_dim,), np.float32)
    high = np.ones((act_dim,), np.float32)
    action_scale = jnp.asarray((high - low) / 2.0).reshape(1, act_dim)
    action_bias = jnp.asarray((high + low) / 2.0).reshape(1, act_dim)

    return dict(w1=w1, b1=b1, w2=w2, b2=b2, w3=w3, b3=b3,
                action_scale=action_scale, action_bias=action_bias)


def actor_reference(x, p):
    """Pure-JAX f32 reference for correctness checking."""
    h = jax.nn.relu(x @ p["w1"] + p["b1"])
    h = jax.nn.relu(h @ p["w2"] + p["b2"])
    mu = jnp.tanh(h @ p["w3"] + p["b3"])
    return mu * p["action_scale"] + p["action_bias"]


if __name__ == "__main__":
    key = jax.random.PRNGKey(0)
    k_param, k_x1, k_x2, k_x3 = jax.random.split(key, 4)

    obs_dim = 32   # flattened observation size (observation_space.shape.prod())
    act_dim = 2    # np.prod(action_space.shape)

    raw_params = init_params(k_param, obs_dim, act_dim)
    prepared = jax.block_until_ready(prepare_params(raw_params))  # one-time prep

    # bf16 MXU path vs f32 reference: ~1e-2 accuracy cost (outputs are tanh-bounded).
    cases = [(8, k_x1),     # tiny batch: single padded tile
             (48, k_x2),    # medium batch: 2 balanced tiles (v7x dual-TC path)
             (300, k_x3)]   # non-multiple batch: 2 tiles of 160 (balanced padding)
    for bsize, kx in cases:
        x = jax.random.normal(kx, (bsize, obs_dim), jnp.float32)
        out = jax.block_until_ready(actor_forward(x, prepared, act_dim=act_dim))
        ref = actor_reference(x, raw_params)
        np.testing.assert_allclose(np.asarray(out), np.asarray(ref),
                                   rtol=2e-2, atol=2e-2)

    print("KERNEL_OK")
</pallas_src>

<mosaic_0001>
module attributes {stable_mosaic.version = 11 : i64} {
  func.func @actor_kernel(%arg0: i32, %arg1: memref<16x32xbf16, #tpu.memory_space<vmem>>, %arg2: memref<32x256xbf16, #tpu.memory_space<vmem>>, %arg3: memref<1x256xf32, #tpu.memory_space<vmem>>, %arg4: memref<256x256xbf16, #tpu.memory_space<vmem>>, %arg5: memref<1x256xf32, #tpu.memory_space<vmem>>, %arg6: memref<256x128xbf16, #tpu.memory_space<vmem>>, %arg7: memref<1x128xf32, #tpu.memory_space<vmem>>, %arg8: memref<1x128xf32, #tpu.memory_space<vmem>>, %arg9: memref<1x128xf32, #tpu.memory_space<vmem>>, %arg10: memref<16x128xf32, #tpu.memory_space<vmem>>) attributes {dimension_semantics = [#tpu.dimension_semantics<parallel>], iteration_bounds = array<i64: 1>, scalar_prefetch = 0 : i64, scratch_operands = 0 : i64, tpu.core_type = #tpu.core_type<tc>, window_params = [{transform_indices = @transform_0, window_bounds = array<i64: 16, 32>}, {pipeline_mode = #tpu.pipeline_mode<synchronous>, transform_indices = @transform_1, window_bounds = array<i64: 32, 256>}, {pipeline_mode = #tpu.pipeline_mode<synchronous>, transform_indices = @transform_2, window_bounds = array<i64: 1, 256>}, {pipeline_mode = #tpu.pipeline_mode<synchronous>, transform_indices = @transform_3, window_bounds = array<i64: 256, 256>}, {pipeline_mode = #tpu.pipeline_mode<synchronous>, transform_indices = @transform_4, window_bounds = array<i64: 1, 256>}, {pipeline_mode = #tpu.pipeline_mode<synchronous>, transform_indices = @transform_5, window_bounds = array<i64: 256, 128>}, {pipeline_mode = #tpu.pipeline_mode<synchronous>, transform_indices = @transform_6, window_bounds = array<i64: 1, 128>}, {pipeline_mode = #tpu.pipeline_mode<synchronous>, transform_indices = @transform_7, window_bounds = array<i64: 1, 128>}, {pipeline_mode = #tpu.pipeline_mode<synchronous>, transform_indices = @transform_8, window_bounds = array<i64: 1, 128>}, {transform_indices = @transform_9, window_bounds = array<i64: 16, 128>}]} {
    %c0 = arith.constant 0 : index
    %c0_0 = arith.constant 0 : index
    %0 = vector.load %arg1[%c0, %c0_0] : memref<16x32xbf16, #tpu.memory_space<vmem>>, vector<16x32xbf16>
    %c0_1 = arith.constant 0 : index
    %c0_2 = arith.constant 0 : index
    %1 = vector.load %arg2[%c0_1, %c0_2] : memref<32x256xbf16, #tpu.memory_space<vmem>>, vector<32x256xbf16>
    %cst = arith.constant dense<0.000000e+00> : vector<16x256xf32>
    %2 = tpu.matmul %0, %1, %cst {dimension_numbers = #tpu.dot_dimension_numbers<[1], [0], [0], [1], [0, 0, 1, 1], [], []>} : vector<16x32xbf16>, vector<32x256xbf16>, vector<16x256xf32> -> vector<16x256xf32>
    %c0_3 = arith.constant 0 : index
    %c0_4 = arith.constant 0 : index
    %3 = vector.load %arg3[%c0_3, %c0_4] : memref<1x256xf32, #tpu.memory_space<vmem>>, vector<1x256xf32>
    %4 = vector.broadcast %3 : vector<1x256xf32> to vector<16x256xf32>
    %5 = arith.addf %2, %4 : vector<16x256xf32>
    %cst_5 = arith.constant 0.000000e+00 : f32
    %6 = vector.broadcast %cst_5 : f32 to vector<16x256xf32>
    %7 = arith.maximumf %5, %6 : vector<16x256xf32>
    %8 = arith.truncf %7 : vector<16x256xf32> to vector<16x256xbf16>
    %c0_6 = arith.constant 0 : index
    %c0_7 = arith.constant 0 : index
    %9 = vector.load %arg4[%c0_6, %c0_7] : memref<256x256xbf16, #tpu.memory_space<vmem>>, vector<256x256xbf16>
    %cst_8 = arith.constant dense<0.000000e+00> : vector<16x256xf32>
    %10 = tpu.matmul %8, %9, %cst_8 {dimension_numbers = #tpu.dot_dimension_numbers<[1], [0], [0], [1], [0, 0, 1, 1], [], []>} : vector<16x256xbf16>, vector<256x256xbf16>, vector<16x256xf32> -> vector<16x256xf32>
    %c0_9 = arith.constant 0 : index
    %c0_10 = arith.constant 0 : index
    %11 = vector.load %arg5[%c0_9, %c0_10] : memref<1x256xf32, #tpu.memory_space<vmem>>, vector<1x256xf32>
    %12 = vector.broadcast %11 : vector<1x256xf32> to vector<16x256xf32>
    %13 = arith.addf %10, %12 : vector<16x256xf32>
    %cst_11 = arith.constant 0.000000e+00 : f32
    %14 = vector.broadcast %cst_11 : f32 to vector<16x256xf32>
    %15 = arith.maximumf %13, %14 : vector<16x256xf32>
    %16 = arith.truncf %15 : vector<16x256xf32> to vector<16x256xbf16>
    %c0_12 = arith.constant 0 : index
    %c0_13 = arith.constant 0 : index
    %17 = vector.load %arg6[%c0_12, %c0_13] : memref<256x128xbf16, #tpu.memory_space<vmem>>, vector<256x128xbf16>
    %cst_14 = arith.constant dense<0.000000e+00> : vector<16x128xf32>
    %18 = tpu.matmul %16, %17, %cst_14 {dimension_numbers = #tpu.dot_dimension_numbers<[1], [0], [0], [1], [0, 0, 1, 1], [], []>} : vector<16x256xbf16>, vector<256x128xbf16>, vector<16x128xf32> -> vector<16x128xf32>
    %c0_15 = arith.constant 0 : index
    %c0_16 = arith.constant 0 : index
    %19 = vector.load %arg7[%c0_15, %c0_16] : memref<1x128xf32, #tpu.memory_space<vmem>>, vector<1x128xf32>
    %20 = vector.broadcast %19 : vector<1x128xf32> to vector<16x128xf32>
    %21 = arith.addf %18, %20 : vector<16x128xf32>
    %22 = math.tanh %21 : vector<16x128xf32>
    %c0_17 = arith.constant 0 : index
    %c0_18 = arith.constant 0 : index
    %23 = vector.load %arg8[%c0_17, %c0_18] : memref<1x128xf32, #tpu.memory_space<vmem>>, vector<1x128xf32>
    %24 = vector.broadcast %23 : vector<1x128xf32> to vector<16x128xf32>
    %25 = arith.mulf %22, %24 : vector<16x128xf32>
    %c0_19 = arith.constant 0 : index
    %c0_20 = arith.constant 0 : index
    %26 = vector.load %arg9[%c0_19, %c0_20] : memref<1x128xf32, #tpu.memory_space<vmem>>, vector<1x128xf32>
    %27 = vector.broadcast %26 : vector<1x128xf32> to vector<16x128xf32>
    %28 = arith.addf %25, %27 : vector<16x128xf32>
    %c0_21 = arith.constant 0 : index
    %c0_22 = arith.constant 0 : index
    %29 = vector.load %arg10[%c0_21, %c0_22] : memref<16x128xf32, #tpu.memory_space<vmem>>, vector<16x128xf32>
    tpu.vector_store %arg10[%c0_21, %c0_22], %28 {strides = array<i32>} : memref<16x128xf32, #tpu.memory_space<vmem>>, vector<16x128xf32>,
    return
  }
  func.func @transform_0(%arg0: i32) -> (i32, i32) {
    %c0_i32 = arith.constant 0 : i32
    %c0_i32_0 = arith.constant 0 : i32
    return %arg0, %c0_i32 : i32, i32
  }
  func.func @transform_1(%arg0: i32) -> (i32, i32) {
    %c0_i32 = arith.constant 0 : i32
    %c0_i32_0 = arith.constant 0 : i32
    %c0_i32_1 = arith.constant 0 : i32
    return %c0_i32, %c0_i32_0 : i32, i32
  }
  func.func @transform_2(%arg0: i32) -> (i32, i32) {
    %c0_i32 = arith.constant 0 : i32
    %c0_i32_0 = arith.constant 0 : i32
    %c0_i32_1 = arith.constant 0 : i32
    return %c0_i32, %c0_i32_0 : i32, i32
  }
  func.func @transform_3(%arg0: i32) -> (i32, i32) {
    %c0_i32 = arith.constant 0 : i32
    %c0_i32_0 = arith.constant 0 : i32
    %c0_i32_1 = arith.constant 0 : i32
    return %c0_i32, %c0_i32_0 : i32, i32
  }
  func.func @transform_4(%arg0: i32) -> (i32, i32) {
    %c0_i32 = arith.constant 0 : i32
    %c0_i32_0 = arith.constant 0 : i32
    %c0_i32_1 = arith.constant 0 : i32
    return %c0_i32, %c0_i32_0 : i32, i32
  }
  func.func @transform_5(%arg0: i32) -> (i32, i32) {
    %c0_i32 = arith.constant 0 : i32
    %c0_i32_0 = arith.constant 0 : i32
    %c0_i32_1 = arith.constant 0 : i32
    return %c0_i32, %c0_i32_0 : i32, i32
  }
  func.func @transform_6(%arg0: i32) -> (i32, i32) {
    %c0_i32 = arith.constant 0 : i32
    %c0_i32_0 = arith.constant 0 : i32
    %c0_i32_1 = arith.constant 0 : i32
    return %c0_i32, %c0_i32_0 : i32, i32
  }
  func.func @transform_7(%arg0: i32) -> (i32, i32) {
    %c0_i32 = arith.constant 0 : i32
    %c0_i32_0 = arith.constant 0 : i32
    %c0_i32_1 = arith.constant 0 : i32
    return %c0_i32, %c0_i32_0 : i32, i32
  }
  func.func @transform_8(%arg0: i32) -> (i32, i32) {
    %c0_i32 = arith.constant 0 : i32
    %c0_i32_0 = arith.constant 0 : i32
    %c0_i32_1 = arith.constant 0 : i32
    return %c0_i32, %c0_i32_0 : i32, i32
  }
  func.func @transform_9(%arg0: i32) -> (i32, i32) {
    %c0_i32 = arith.constant 0 : i32
    %c0_i32_0 = arith.constant 0 : i32
    return %arg0, %c0_i32 : i32, i32
  }
}

</mosaic_0001>

<llo_original>
// kernel: actor_forward.1
$region0: #{actor_forward.1}
  #allocation0 [shape = 'u32[]', space=smem, size = 0x4, offset = 0x4, fixed_abs, tag = 'smem constant byte address 0x4 - core index']
  #allocation1 [shape = 'u32[144,128]{1,0:T(1,128)}', space=vmem, size = 0x12000, scoped, tag = 'internal scratch']
  %s0 = inlined_call_operand.vmem [shape: bf16[16,32], index: 0, kind: input, shape index: {}]
  %s1 = inlined_call_operand.vmem [shape: bf16[32,256], index: 1, kind: input, shape index: {}]
  %s2 = inlined_call_operand.vmem [shape: f32[1,256], index: 2, kind: input, shape index: {}]
  %s3 = inlined_call_operand.hbm [shape: bf16[256,256], index: 3, kind: input, shape index: {}]
  %s4 = inlined_call_operand.hbm [shape: f32[1,256], index: 4, kind: input, shape index: {}]
  %s5 = inlined_call_operand.hbm [shape: bf16[256,128], index: 5, kind: input, shape index: {}]
  %s6 = inlined_call_operand.vmem [shape: f32[1,128], index: 6, kind: input, shape index: {}]
  %s7 = inlined_call_operand.hbm [shape: f32[1,128], index: 7, kind: input, shape index: {}]
  %s8 = inlined_call_operand.hbm [shape: f32[1,128], index: 8, kind: input, shape index: {}]
  %s9 = inlined_call_operand.vmem [shape: f32[16,128], index: 9, kind: output, shape index: {}]
  %s10 = sld [smem:[#allocation0]]
  $region66: #{actor_forward.1} parent=0
    _
  %s12 = ssub.s32 1, %s10
  %s13 = scalar_select 0, %s12, %s10
  $region1: #{actor_forward.1} parent=0
    #allocation2 [shape = 'u8[131072]{0}', space=vmem, size = 0x20000, scoped, tag = 'input window, operand 3, single buffered']
    #allocation3 [shape = 's32[1]{0}', space=sflag, size = 0x4, scoped, tag = 'scoped memory for actor_forward.1']
    #allocation4 [shape = 'u8[1024]{0}', space=vmem, size = 0x400, scoped, tag = 'input window, operand 4, single buffered']
    #allocation5 [shape = 's32[1]{0}', space=sflag, size = 0x4, scoped, tag = 'scoped memory for actor_forward.1']
    #allocation6 [shape = 'u8[65536]{0}', space=vmem, size = 0x10000, scoped, tag = 'input window, operand 5, single buffered']
    #allocation7 [shape = 'u8[512]{0}', space=vmem, size = 0x400, scoped, tag = 'input window, operand 7, single buffered']
    #allocation8 [shape = 's32[1]{0}', space=sflag, size = 0x4, scoped, tag = 'scoped memory for actor_forward.1']
    #allocation9 [shape = 'u8[512]{0}', space=vmem, size = 0x400, scoped, tag = 'input window, operand 8, single buffered']
    %14 = vsyncpa [#allocation3], 0
    %15 = vsyncpa [#allocation5], 0
    %16 = vsyncpa [#allocation8], 0
    // Predicated region
    $region2: #{actor_forward.1} parent=1 // pred_check
      _
    $region3: #{actor_forward.1} parent=1 // pred_check_branch
      %18 = sbr.rel (0) target = $region5
    $region4: #{actor_forward.1} parent=1 // pred_region
      _
    $region5: #{actor_forward.1} parent=1 // pred_fallthru
      _
    // Predicated region
    $region6: #{actor_forward.1} parent=1 // pred_check
      _
    $region7: #{actor_forward.1} parent=1 // pred_check_branch
      %20 = sbr.rel (0) target = $region9
    $region8: #{actor_forward.1} parent=1 // pred_region
      _
    $region9: #{actor_forward.1} parent=1 // pred_fallthru
      _
    // Predicated region
    $region10: #{actor_forward.1} parent=1 // pred_check
      _
    $region11: #{actor_forward.1} parent=1 // pred_check_branch
      %22 = sbr.rel (0) target = $region13
    $region12: #{actor_forward.1} parent=1 // pred_region
      _
    $region13: #{actor_forward.1} parent=1 // pred_fallthru
      _
    // Predicated region
    $region14: #{actor_forward.1} parent=1 // pred_check
      _
    $region15: #{actor_forward.1} parent=1 // pred_check_branch
      %24 = sbr.rel (0) target = $region17
    $region16: #{actor_forward.1} parent=1 // pred_region
      %s26 = ssub.s32 4096, 4096
      %27 = vsyncadd [#allocation3], %s26
      %s28 = sshll.u32 [#allocation2], 4
      %s29 = int_to_ptr.vmem [resolvable:$true] %s28
      %34 = dma.hbm_to_vmem [thread:$0]  %s3, 4096, %s29, [#allocation3], 128, 128, 8
    $region17: #{actor_forward.1} parent=1 // pred_fallthru
      _
    // Predicated region
    $region18: #{actor_forward.1} parent=1 // pred_check
      _
    $region19: #{actor_forward.1} parent=1 // pred_check_branch
      %36 = sbr.rel (0) target = $region21
    $region20: #{actor_forward.1} parent=1 // pred_region
      %s38 = ssub.s32 32, 32
      %39 = vsyncadd [#allocation5], %s38
      %s41 = sshll.u32 [#allocation4], 4
      %s42 = int_to_ptr.vmem [resolvable:$true] %s41
      %44 = dma.hbm_to_vmem [thread:$0]  %s4, 32, %s42, [#allocation5]
    $region21: #{actor_forward.1} parent=1 // pred_fallthru
      _
    // Predicated region
    $region22: #{actor_forward.1} parent=1 // pred_check
      _
    $region23: #{actor_forward.1} parent=1 // pred_check_branch
      %46 = sbr.rel (0) target = $region25
    $region24: #{actor_forward.1} parent=1 // pred_region
      %s48 = ssub.s32 2048, 2048
      %49 = vsyncadd [#allocation5], %s48
      %s50 = sshll.u32 [#allocation6], 4
      %s51 = int_to_ptr.vmem [resolvable:$true] %s50
      %56 = dma.hbm_to_vmem [thread:$0]  %s5, 2048, %s51, [#allocation5], 64, 64, 4
    $region25: #{actor_forward.1} parent=1 // pred_fallthru
      _
    // Predicated region
    $region26: #{actor_forward.1} parent=1 // pred_check
      _
    $region27: #{actor_forward.1} parent=1 // pred_check_branch
      %58 = sbr.rel (0) target = $region29
    $region28: #{actor_forward.1} parent=1 // pred_region
      _
    $region29: #{actor_forward.1} parent=1 // pred_fallthru
      _
    // Predicated region
    $region30: #{actor_forward.1} parent=1 // pred_check
      _
    $region31: #{actor_forward.1} parent=1 // pred_check_branch
      %60 = sbr.rel (0) target = $region33
    $region32: #{actor_forward.1} parent=1 // pred_region
      %s62 = ssub.s32 16, 16
      %63 = vsyncadd [#allocation8], %s62
      %s65 = sshll.u32 [#allocation7], 4
      %s66 = int_to_ptr.vmem [resolvable:$true] %s65
      %68 = dma.hbm_to_vmem [thread:$0]  %s7, 16, %s66, [#allocation8]
    $region33: #{actor_forward.1} parent=1 // pred_fallthru
      _
    // Predicated region
    $region34: #{actor_forward.1} parent=1 // pred_check
      _
    $region35: #{actor_forward.1} parent=1 // pred_check_branch
      %70 = sbr.rel (0) target = $region37
    $region36: #{actor_forward.1} parent=1 // pred_region
      %s72 = ssub.s32 16, 16
      %73 = vsyncadd [#allocation8], %s72
      %s75 = sshll.u32 [#allocation9], 4
      %s76 = int_to_ptr.vmem [resolvable:$true] %s75
      %78 = dma.hbm_to_vmem [thread:$0]  %s8, 16, %s76, [#allocation8]
    $region37: #{actor_forward.1} parent=1 // pred_fallthru
      _
    // Predicated region
    $region38: #{actor_forward.1} parent=1 // pred_check
      _
    $region39: #{actor_forward.1} parent=1 // pred_check_branch
      %80 = sbr.rel (0) target = $region41
    $region40: #{actor_forward.1} parent=1 // pred_region
      %81 = dma.done [#allocation3], 4096
    $region41: #{actor_forward.1} parent=1 // pred_fallthru
      _
    // Predicated region
    $region42: #{actor_forward.1} parent=1 // pred_check
      _
    $region43: #{actor_forward.1} parent=1 // pred_check_branch
      %83 = sbr.rel (0) target = $region45
    $region44: #{actor_forward.1} parent=1 // pred_region
      %84 = dma.done [#allocation5], 32
    $region45: #{actor_forward.1} parent=1 // pred_fallthru
      _
    // Predicated region
    $region46: #{actor_forward.1} parent=1 // pred_check
      _
    $region47: #{actor_forward.1} parent=1 // pred_check_branch
      %86 = sbr.rel (0) target = $region49
    $region48: #{actor_forward.1} parent=1 // pred_region
      %87 = dma.done [#allocation5], 2048
    $region49: #{actor_forward.1} parent=1 // pred_fallthru
      _
    // Predicated region
    $region50: #{actor_forward.1} parent=1 // pred_check
      _
    $region51: #{actor_forward.1} parent=1 // pred_check_branch
      %89 = sbr.rel (0) target = $region53
    $region52: #{actor_forward.1} parent=1 // pred_region
      %90 = dma.done [#allocation8], 16
    $region53: #{actor_forward.1} parent=1 // pred_fallthru
      _
    // Predicated region
    $region54: #{actor_forward.1} parent=1 // pred_check
      _
    $region55: #{actor_forward.1} parent=1 // pred_check_branch
      %92 = sbr.rel (0) target = $region57
    $region56: #{actor_forward.1} parent=1 // pred_region
      %93 = dma.done [#allocation8], 16
    $region57: #{actor_forward.1} parent=1 // pred_fallthru
      _
    %v95 = vld [vmem:[%s0] sm:$0xf]
    %v96 = vld [vmem:[%s0 + $0x4] sm:$0xf]
    %v97 = vld [vmem:[%s1] sm:$0xff]
    %v98 = vld [vmem:[%s1 + $0x8] sm:$0xff]
    %v99 = vld [vmem:[%s1 + $0x10] sm:$0xff]
    %v100 = vld [vmem:[%s1 + $0x18] sm:$0xff]
    %v101 = vld [vmem:[%s2] sm:$0x3]
    %v103 = vlaneseq
    %v104 = vshrl.u32 %v103, 7
    %v105 = vsub.s32 0, %v104
    %v106 = vrot.slane %v101, %v105
    %v107 = vlaneseq
    %v108 = vshrl.u32 %v107, 7
    %v109 = vsub.s32 1, %v108
    %v110 = vrot.slane %v101, %v109
    %v115 = vunpack.c.l.b16 %v95
    %v116 = vunpack.c.l.b16 %v96
    %v117 = vpack.c.b16 %v116, %v115
    %v122 = vunpack.c.l.b16 %v97
    %v123 = vunpack.c.h.b16 %v97
    %v124 = vunpack.c.l.b16 %v98
    %v125 = vunpack.c.h.b16 %v98
    %v126 = vunpack.c.l.b16 %v99
    %v127 = vunpack.c.h.b16 %v99
    %v128 = vunpack.c.l.b16 %v100
    %v129 = vunpack.c.h.b16 %v100
    %v130 = vpack.c.b16 %v124, %v122
    %v131 = vpack.c.b16 %v125, %v123
    %v132 = vpack.c.b16 %v128, %v126
    %v133 = vpack.c.b16 %v129, %v127
    %vm138 = vcmask 261120
    %v140 = vsel %vm138, %v117, 0
    %142 = vmatprep.subr.bf16.mxu0 0
    %143 = vmatpush1.bf16.msra.mxu0 0
    %144 = vmatprep.subr.bf16.mxu0 0
    %145 = vmatpush1.bf16.msra.mxu0 0
    %146 = vmatprep.subr.bf16.mxu0 0
    %147 = vmatpush1.bf16.msra.mxu0 0
    %148 = vmatprep.subr.bf16.mxu0 0
    %149 = vmatpush1.bf16.msra.mxu0 0
    %150 = vmatprep.subr.bf16.mxu0 0
    %151 = vmatpush1.bf16.msra.mxu0 0
    %152 = vmatprep.subr.bf16.mxu0 0
    %153 = vmatpush1.bf16.msra.mxu0 0
    %154 = vmatprep.subr.bf16.mxu0 %v133
    %155 = vmatpush1.bf16.msra.mxu0 %v132
    %156 = vmatprep.subr.bf16.mxu0 %v131
    %157 = vmatpush1.bf16.msra.mxu0 %v130
    %158 = vmatprep.subr.bf16.mxu0 0
    %159 = vmatpush2.bf16.msra.mxu0 0
    %160 = vmatprep.subr.bf16.mxu0 0
    %161 = vmatpush2.bf16.msra.mxu0 0
    %162 = vmatprep.subr.bf16.mxu0 0
    %163 = vmatpush2.bf16.msra.mxu0 0
    %164 = vmatprep.subr.bf16.mxu0 0
    %165 = vmatpush2.bf16.msra.mxu0 0
    %166 = vmatprep.subr.bf16.mxu0 0
    %167 = vmatpush2.bf16.msra.mxu0 0
    %168 = vmatprep.subr.bf16.mxu0 0
    %169 = vmatpush2.bf16.msra.mxu0 0
    %170 = vmatprep.subr.bf16.mxu0 0
    %171 = vmatpush2.bf16.msra.mxu0 0
    %172 = vmatprep.subr.bf16.mxu0 0
    %173 = vmatpush2.bf16.msra.mxu0 0
    %174 = vmatprep.mubr.bf16.mxu0 0
    %175 = vmatmul.mubr.bf16.gmra.mxu0 %v140
    %v176 = vpop.f32.mrf.mxu0
    %v177 = vadd.f32 %v106, %v176
    %v178 = vpop.f32.mrf.mxu0
    %v179 = vadd.f32 %v110, %v178
    %v180 = vpop.f32.mrf.mxu0
    %v181 = vadd.f32 %v106, %v180
    %v182 = vpop.f32.mrf.mxu0
    %v183 = vadd.f32 %v110, %v182
    %184 = vdwg.mxu0
    %v185 = vmax.f32 %v177, 0.0
    %v186 = vmax.f32 %v179, 0.0
    %v187 = vmax.f32 %v181, 0.0
    %v188 = vmax.f32 %v183, 0.0
    %v189 = vpack.c.bf16 %v187, %v185
    %v190 = vpack.c.bf16 %v188, %v186
    %v191 = vld [vmem:[#allocation2] sm:$0xff]
    %v192 = vld [vmem:[#allocation2 + $0x8] sm:$0xff]
    %v193 = vld [vmem:[#allocation2 + $0x10] sm:$0xff]
    %v194 = vld [vmem:[#allocation2 + $0x18] sm:$0xff]
    %v195 = vld [vmem:[#allocation2 + $0x20] sm:$0xff]
    %v196 = vld [vmem:[#allocation2 + $0x28] sm:$0xff]
    %v197 = vld [vmem:[#allocation2 + $0x30] sm:$0xff]
    %v198 = vld [vmem:[#allocation2 + $0x38] sm:$0xff]
    %v199 = vld [vmem:[#allocation2 + $0x40] sm:$0xff]
    %v200 = vld [vmem:[#allocation2 + $0x48] sm:$0xff]
    %v201 = vld [vmem:[#allocation2 + $0x50] sm:$0xff]
    %v202 = vld [vmem:[#allocation2 + $0x58] sm:$0xff]
    %v203 = vld [vmem:[#allocation2 + $0x60] sm:$0xff]
    %v204 = vld [vmem:[#allocation2 + $0x68] sm:$0xff]
    %v205 = vld [vmem:[#allocation2 + $0x70] sm:$0xff]
    %v206 = vld [vmem:[#allocation2 + $0x78] sm:$0xff]
    %v207 = vld [vmem:[#allocation2 + $0x80] sm:$0xff]
    %v208 = vld [vmem:[#allocation2 + $0x88] sm:$0xff]
    %v209 = vld [vmem:[#allocation2 + $0x90] sm:$0xff]
    %v210 = vld [vmem:[#allocation2 + $0x98] sm:$0xff]
    %v211 = vld [vmem:[#allocation2 + $0xa0] sm:$0xff]
    %v212 = vld [vmem:[#allocation2 + $0xa8] sm:$0xff]
    %v213 = vld [vmem:[#allocation2 + $0xb0] sm:$0xff]
    %v214 = vld [vmem:[#allocation2 + $0xb8] sm:$0xff]
    %v215 = vld [vmem:[#allocation2 + $0xc0] sm:$0xff]
    %v216 = vld [vmem:[#allocation2 + $0xc8] sm:$0xff]
    %v217 = vld [vmem:[#allocation2 + $0xd0] sm:$0xff]
    %v218 = vld [vmem:[#allocation2 + $0xd8] sm:$0xff]
    %v219 = vld [vmem:[#allocation2 + $0xe0] sm:$0xff]
    %v220 = vld [vmem:[#allocation2 + $0xe8] sm:$0xff]
    %v221 = vld [vmem:[#allocation2 + $0xf0] sm:$0xff]
    %v222 = vld [vmem:[#allocation2 + $0xf8] sm:$0xff]
    %v223 = vld [vmem:[#allocation4] sm:$0x3]
    %v225 = vlaneseq
    %v226 = vshrl.u32 %v225, 7
    %v227 = vsub.s32 0, %v226
    %v228 = vrot.slane %v223, %v227
    %v229 = vlaneseq
    %v230 = vshrl.u32 %v229, 7
    %v231 = vsub.s32 1, %v230
    %v232 = vrot.slane %v223, %v231
    %v267 = vunpack.c.l.b16 %v191
    %v268 = vunpack.c.h.b16 %v191
    %v269 = vunpack.c.l.b16 %v192
    %v270 = vunpack.c.h.b16 %v192
    %v271 = vunpack.c.l.b16 %v193
    %v272 = vunpack.c.h.b16 %v193
    %v273 = vunpack.c.l.b16 %v194
    %v274 = vunpack.c.h.b16 %v194
    %v275 = vunpack.c.l.b16 %v195
    %v276 = vunpack.c.h.b16 %v195
    %v277 = vunpack.c.l.b16 %v196
    %v278 = vunpack.c.h.b16 %v196
    %v279 = vunpack.c.l.b16 %v197
    %v280 = vunpack.c.h.b16 %v197
    %v281 = vunpack.c.l.b16 %v198
    %v282 = vunpack.c.h.b16 %v198
    %v283 = vunpack.c.l.b16 %v199
    %v284 = vunpack.c.h.b16 %v199
    %v285 = vunpack.c.l.b16 %v200
    %v286 = vunpack.c.h.b16 %v200
    %v287 = vunpack.c.l.b16 %v201
    %v288 = vunpack.c.h.b16 %v201
    %v289 = vunpack.c.l.b16 %v202
    %v290 = vunpack.c.h.b16 %v202
    %v291 = vunpack.c.l.b16 %v203
    %v292 = vunpack.c.h.b16 %v203
    %v293 = vunpack.c.l.b16 %v204
    %v294 = vunpack.c.h.b16 %v204
    %v295 = vunpack.c.l.b16 %v205
    %v296 = vunpack.c.h.b16 %v205
    %v297 = vunpack.c.l.b16 %v206
    %v298 = vunpack.c.h.b16 %v206
    %v299 = vunpack.c.l.b16 %v207
    %v300 = vunpack.c.h.b16 %v207
    %v301 = vunpack.c.l.b16 %v208
    %v302 = vunpack.c.h.b16 %v208
    %v303 = vunpack.c.l.b16 %v209
    %v304 = vunpack.c.h.b16 %v209
    %v305 = vunpack.c.l.b16 %v210
    %v306 = vunpack.c.h.b16 %v210
    %v307 = vunpack.c.l.b16 %v211
    %v308 = vunpack.c.h.b16 %v211
    %v309 = vunpack.c.l.b16 %v212
    %v310 = vunpack.c.h.b16 %v212
    %v311 = vunpack.c.l.b16 %v213
    %v312 = vunpack.c.h.b16 %v213
    %v313 = vunpack.c.l.b16 %v214
    %v314 = vunpack.c.h.b16 %v214
    %v315 = vunpack.c.l.b16 %v215
    %v316 = vunpack.c.h.b16 %v215
    %v317 = vunpack.c.l.b16 %v216
    %v318 = vunpack.c.h.b16 %v216
    %v319 = vunpack.c.l.b16 %v217
    %v320 = vunpack.c.h.b16 %v217
    %v321 = vunpack.c.l.b16 %v218
    %v322 = vunpack.c.h.b16 %v218
    %v323 = vunpack.c.l.b16 %v219
    %v324 = vunpack.c.h.b16 %v219
    %v325 = vunpack.c.l.b16 %v220
    %v326 = vunpack.c.h.b16 %v220
    %v327 = vunpack.c.l.b16 %v221
    %v328 = vunpack.c.h.b16 %v221
    %v329 = vunpack.c.l.b16 %v222
    %v330 = vunpack.c.h.b16 %v222
    %v331 = vpack.c.b16 %v269, %v267
    %v332 = vpack.c.b16 %v270, %v268
    %v333 = vpack.c.b16 %v273, %v271
    %v334 = vpack.c.b16 %v274, %v272
    %v335 = vpack.c.b16 %v277, %v275
    %v336 = vpack.c.b16 %v278, %v276
    %v337 = vpack.c.b16 %v281, %v279
    %v338 = vpack.c.b16 %v282, %v280
    %v339 = vpack.c.b16 %v285, %v283
    %v340 = vpack.c.b16 %v286, %v284
    %v341 = vpack.c.b16 %v289, %v287
    %v342 = vpack.c.b16 %v290, %v288
    %v343 = vpack.c.b16 %v293, %v291
    %v344 = vpack.c.b16 %v294, %v292
    %v345 = vpack.c.b16 %v297, %v295
    %v346 = vpack.c.b16 %v298, %v296
    %v347 = vpack.c.b16 %v301, %v299
    %v348 = vpack.c.b16 %v302, %v300
    %v349 = vpack.c.b16 %v305, %v303
    %v350 = vpack.c.b16 %v306, %v304
    %v351 = vpack.c.b16 %v309, %v307
    %v352 = vpack.c.b16 %v310, %v308
    %v353 = vpack.c.b16 %v313, %v311
    %v354 = vpack.c.b16 %v314, %v312
    %v355 = vpack.c.b16 %v317, %v315
    %v356 = vpack.c.b16 %v318, %v316
    %v357 = vpack.c.b16 %v321, %v319
    %v358 = vpack.c.b16 %v322, %v320
    %v359 = vpack.c.b16 %v325, %v323
    %v360 = vpack.c.b16 %v326, %v324
    %v361 = vpack.c.b16 %v329, %v327
    %v362 = vpack.c.b16 %v330, %v328
    %395 = vmatprep.subr.bf16.mxu0 %v346
    %396 = vmatpush1.bf16.msra.mxu0 %v345
    %397 = vmatprep.subr.bf16.mxu0 %v344
    %398 = vmatpush1.bf16.msra.mxu0 %v343
    %399 = vmatprep.subr.bf16.mxu0 %v342
    %400 = vmatpush1.bf16.msra.mxu0 %v341
    %401 = vmatprep.subr.bf16.mxu0 %v340
    %402 = vmatpush1.bf16.msra.mxu0 %v339
    %403 = vmatprep.subr.bf16.mxu0 %v338
    %404 = vmatpush1.bf16.msra.mxu0 %v337
    %405 = vmatprep.subr.bf16.mxu0 %v336
    %406 = vmatpush1.bf16.msra.mxu0 %v335
    %407 = vmatprep.subr.bf16.mxu0 %v334
    %408 = vmatpush1.bf16.msra.mxu0 %v333
    %409 = vmatprep.subr.bf16.mxu0 %v332
    %410 = vmatpush1.bf16.msra.mxu0 %v331
    %411 = vmatprep.subr.bf16.mxu0 %v362
    %412 = vmatpush2.bf16.msra.mxu0 %v361
    %413 = vmatprep.subr.bf16.mxu0 %v360
    %414 = vmatpush2.bf16.msra.mxu0 %v359
    %415 = vmatprep.subr.bf16.mxu0 %v358
    %416 = vmatpush2.bf16.msra.mxu0 %v357
    %417 = vmatprep.subr.bf16.mxu0 %v356
    %418 = vmatpush2.bf16.msra.mxu0 %v355
    %419 = vmatprep.subr.bf16.mxu0 %v354
    %420 = vmatpush2.bf16.msra.mxu0 %v353
    %421 = vmatprep.subr.bf16.mxu0 %v352
    %422 = vmatpush2.bf16.msra.mxu0 %v351
    %423 = vmatprep.subr.bf16.mxu0 %v350
    %424 = vmatpush2.bf16.msra.mxu0 %v349
    %425 = vmatprep.subr.bf16.mxu0 %v348
    %426 = vmatpush2.bf16.msra.mxu0 %v347
    %427 = vmatprep.mubr.bf16.mxu0 %v190
    %428 = vmatmul.mubr.bf16.gmra.mxu0 %v189
    %v429 = vpop.f32.mrf.mxu0
    %v430 = vadd.f32 %v228, %v429
    %v431 = vpop.f32.mrf.mxu0
    %v432 = vadd.f32 %v232, %v431
    %v433 = vpop.f32.mrf.mxu0
    %v434 = vadd.f32 %v228, %v433
    %v435 = vpop.f32.mrf.mxu0
    %v436 = vadd.f32 %v232, %v435
    %437 = vdwg.mxu0
    %v438 = vmax.f32 %v430, 0.0
    %v439 = vmax.f32 %v432, 0.0
    %v440 = vmax.f32 %v434, 0.0
    %v441 = vmax.f32 %v436, 0.0
    %v442 = vpack.c.bf16 %v440, %v438
    %v443 = vpack.c.bf16 %v441, %v439
    %v444 = vld [vmem:[#allocation6] sm:$0xf]
    %v445 = vld [vmem:[#allocation6 + $0x4] sm:$0xf]
    %v446 = vld [vmem:[#allocation6 + $0x8] sm:$0xf]
    %v447 = vld [vmem:[#allocation6 + $0xc] sm:$0xf]
    %v448 = vld [vmem:[#allocation6 + $0x10] sm:$0xf]
    %v449 = vld [vmem:[#allocation6 + $0x14] sm:$0xf]
    %v450 = vld [vmem:[#allocation6 + $0x18] sm:$0xf]
    %v451 = vld [vmem:[#allocation6 + $0x1c] sm:$0xf]
    %v452 = vld [vmem:[#allocation6 + $0x20] sm:$0xf]
    %v453 = vld [vmem:[#allocation6 + $0x24] sm:$0xf]
    %v454 = vld [vmem:[#allocation6 + $0x28] sm:$0xf]
    %v455 = vld [vmem:[#allocation6 + $0x2c] sm:$0xf]
    %v456 = vld [vmem:[#allocation6 + $0x30] sm:$0xf]
    %v457 = vld [vmem:[#allocation6 + $0x34] sm:$0xf]
    %v458 = vld [vmem:[#allocation6 + $0x38] sm:$0xf]
    %v459 = vld [vmem:[#allocation6 + $0x3c] sm:$0xf]
    %v460 = vld [vmem:[#allocation6 + $0x40] sm:$0xf]
    %v461 = vld [vmem:[#allocation6 + $0x44] sm:$0xf]
    %v462 = vld [vmem:[#allocation6 + $0x48] sm:$0xf]
    %v463 = vld [vmem:[#allocation6 + $0x4c] sm:$0xf]
    %v464 = vld [vmem:[#allocation6 + $0x50] sm:$0xf]
    %v465 = vld [vmem:[#allocation6 + $0x54] sm:$0xf]
    %v466 = vld [vmem:[#allocation6 + $0x58] sm:$0xf]
    %v467 = vld [vmem:[#allocation6 + $0x5c] sm:$0xf]
    %v468 = vld [vmem:[#allocation6 + $0x60] sm:$0xf]
    %v469 = vld [vmem:[#allocation6 + $0x64] sm:$0xf]
    %v470 = vld [vmem:[#allocation6 + $0x68] sm:$0xf]
    %v471 = vld [vmem:[#allocation6 + $0x6c] sm:$0xf]
    %v472 = vld [vmem:[#allocation6 + $0x70] sm:$0xf]
    %v473 = vld [vmem:[#allocation6 + $0x74] sm:$0xf]
    %v474 = vld [vmem:[#allocation6 + $0x78] sm:$0xf]
    %v475 = vld [vmem:[#allocation6 + $0x7c] sm:$0xf]
    %v476 = vld [vmem:[%s6] sm:$0x1]
    %v478 = vlaneseq
    %v479 = vshrl.u32 %v478, 7
    %v480 = vsub.s32 0, %v479
    %v481 = vrot.slane %v476, %v480
    %v515 = vunpack.c.l.b16 %v444
    %v516 = vunpack.c.l.b16 %v445
    %v517 = vunpack.c.l.b16 %v446
    %v518 = vunpack.c.l.b16 %v447
    %v519 = vunpack.c.l.b16 %v448
    %v520 = vunpack.c.l.b16 %v449
    %v521 = vunpack.c.l.b16 %v450
    %v522 = vunpack.c.l.b16 %v451
    %v523 = vunpack.c.l.b16 %v452
    %v524 = vunpack.c.l.b16 %v453
    %v525 = vunpack.c.l.b16 %v454
    %v526 = vunpack.c.l.b16 %v455
    %v527 = vunpack.c.l.b16 %v456
    %v528 = vunpack.c.l.b16 %v457
    %v529 = vunpack.c.l.b16 %v458
    %v530 = vunpack.c.l.b16 %v459
    %v531 = vunpack.c.l.b16 %v460
    %v532 = vunpack.c.l.b16 %v461
    %v533 = vunpack.c.l.b16 %v462
    %v534 = vunpack.c.l.b16 %v463
    %v535 = vunpack.c.l.b16 %v464
    %v536 = vunpack.c.l.b16 %v465
    %v537 = vunpack.c.l.b16 %v466
    %v538 = vunpack.c.l.b16 %v467
    %v539 = vunpack.c.l.b16 %v468
    %v540 = vunpack.c.l.b16 %v469
    %v541 = vunpack.c.l.b16 %v470
    %v542 = vunpack.c.l.b16 %v471
    %v543 = vunpack.c.l.b16 %v472
    %v544 = vunpack.c.l.b16 %v473
    %v545 = vunpack.c.l.b16 %v474
    %v546 = vunpack.c.l.b16 %v475
    %v547 = vpack.c.b16 %v516, %v515
    %v548 = vpack.c.b16 %v518, %v517
    %v549 = vpack.c.b16 %v520, %v519
    %v550 = vpack.c.b16 %v522, %v521
    %v551 = vpack.c.b16 %v524, %v523
    %v552 = vpack.c.b16 %v526, %v525
    %v553 = vpack.c.b16 %v528, %v527
    %v554 = vpack.c.b16 %v530, %v529
    %v555 = vpack.c.b16 %v532, %v531
    %v556 = vpack.c.b16 %v534, %v533
    %v557 = vpack.c.b16 %v536, %v535
    %v558 = vpack.c.b16 %v538, %v537
    %v559 = vpack.c.b16 %v540, %v539
    %v560 = vpack.c.b16 %v542, %v541
    %v561 = vpack.c.b16 %v544, %v543
    %v562 = vpack.c.b16 %v546, %v545
    %579 = vmatprep.subr.bf16.mxu0 0
    %580 = vmatpush1.bf16.msra.mxu0 %v554
    %581 = vmatprep.subr.bf16.mxu0 0
    %582 = vmatpush1.bf16.msra.mxu0 %v553
    %583 = vmatprep.subr.bf16.mxu0 0
    %584 = vmatpush1.bf16.msra.mxu0 %v552
    %585 = vmatprep.subr.bf16.mxu0 0
    %586 = vmatpush1.bf16.msra.mxu0 %v551
    %587 = vmatprep.subr.bf16.mxu0 0
    %588 = vmatpush1.bf16.msra.mxu0 %v550
    %589 = vmatprep.subr.bf16.mxu0 0
    %590 = vmatpush1.bf16.msra.mxu0 %v549
    %591 = vmatprep.subr.bf16.mxu0 0
    %592 = vmatpush1.bf16.msra.mxu0 %v548
    %593 = vmatprep.subr.bf16.mxu0 0
    %594 = vmatpush1.bf16.msra.mxu0 %v547
    %595 = vmatprep.subr.bf16.mxu0 0
    %596 = vmatpush2.bf16.msra.mxu0 %v562
    %597 = vmatprep.subr.bf16.mxu0 0
    %598 = vmatpush2.bf16.msra.mxu0 %v561
    %599 = vmatprep.subr.bf16.mxu0 0
    %600 = vmatpush2.bf16.msra.mxu0 %v560
    %601 = vmatprep.subr.bf16.mxu0 0
    %602 = vmatpush2.bf16.msra.mxu0 %v559
    %603 = vmatprep.subr.bf16.mxu0 0
    %604 = vmatpush2.bf16.msra.mxu0 %v558
    %605 = vmatprep.subr.bf16.mxu0 0
    %606 = vmatpush2.bf16.msra.mxu0 %v557
    %607 = vmatprep.subr.bf16.mxu0 0
    %608 = vmatpush2.bf16.msra.mxu0 %v556
    %609 = vmatprep.subr.bf16.mxu0 0
    %610 = vmatpush2.bf16.msra.mxu0 %v555
    %611 = vmatprep.mubr.bf16.mxu0 %v443
    %612 = vmatmul.mubr.bf16.gmra.mxu0 %v442
    %v613 = vpop.f32.mrf.mxu0
    %v614 = vadd.f32 %v481, %v613
    %v615 = vpop.f32.mrf.mxu0
    %v616 = vpop.f32.mrf.mxu0
    %v617 = vadd.f32 %v481, %v616
    %v618 = vpop.f32.mrf.mxu0
    %619 = vdwg.mxu0
    %v620 = vtanh.pop %v614
    %v621 = vtanh.pop %v617
    %v622 = vld [vmem:[#allocation7] sm:$0x1]
    %v624 = vlaneseq
    %v625 = vshrl.u32 %v624, 7
    %v626 = vsub.s32 0, %v625
    %v627 = vrot.slane %v622, %v626
    %v629 = vmul.f32 %v620, %v627
    %v630 = vmul.f32 %v621, %v627
    %v631 = vld [vmem:[#allocation9] sm:$0x1]
    %v633 = vlaneseq
    %v634 = vshrl.u32 %v633, 7
    %v635 = vsub.s32 0, %v634
    %v636 = vrot.slane %v631, %v635
    %v638 = vadd.f32 %v629, %v636
    %v639 = vadd.f32 %v630, %v636
    %640 = vst [vmem:[%s9] sm:$0xff] %v638
    %641 = vst [vmem:[%s9 + $0x8] sm:$0xff] %v639
    // Predicated region
    $region58: #{actor_forward.1} parent=1 // pred_check
      _
    $region59: #{actor_forward.1} parent=1 // pred_check_branch
      %643 = sbr.rel (0) target = $region61
    $region60: #{actor_forward.1} parent=1 // pred_region
      _
    $region61: #{actor_forward.1} parent=1 // pred_fallthru
      _
    // Predicated region
    $region62: #{actor_forward.1} parent=1 // pred_check
      _
    $region63: #{actor_forward.1} parent=1 // pred_check_branch
      %645 = sbr.rel (0) target = $region65
    $region64: #{actor_forward.1} parent=1 // pred_region
      _
    $region65: #{actor_forward.1} parent=1 // pred_fallthru
      _
    %646 = vsyncpa [#allocation3], 1
    %647 = vsyncpa [#allocation5], 1
    %648 = vsyncpa [#allocation8], 1

</llo_original>
